<compile_context>
chip_gen: v5e
topology: v5e:2x2
jax: 0.10.0
libtpu: 0.0.40
codegen_flags: <defaults>
</compile_context>

<pallas_src>
import functools

import numpy as np
import jax
import jax.numpy as jnp
from jax.experimental import pallas as pl
from jax.experimental.pallas import tpu as pltpu

KX, KY = 7, 13      # torchvision GaussianBlur kernel_size=(kx along W, ky along H)
SIGMA = 10.0        # TODO(synk): torchvision samples sigma ~ U(9, 11) per call; fixed to
                    # the midpoint 10.0 for deterministic behavior.
THRESH = 0.1

LANE = 128              # pixel axis padded to a multiple of this (lane-dense stores)
SUBLANE_I8 = 32         # int8 output sublane tile; tn is a multiple of this
VMEM_BUDGET = 40 << 20  # per-step working-set target (safe w.r.t. v7x 64 MiB physical)
VMEM_LIMIT_CAP = 48 << 20
MAX_TN = 2048           # diminishing returns past ~8 MiB of image rows per step


def _round_up(v, m):
    return ((v + m - 1) // m) * m


def _gaussian_kernel1d(ksize, sigma):
    lim = (ksize - 1) / 2.0
    x = np.linspace(-lim, lim, ksize)
    pdf = np.exp(-0.5 * (x / sigma) ** 2)
    return pdf / pdf.sum()


def _reflect_index(q, size):
    if q < 0:
        q = -q
    if q >= size:
        q = 2 * size - 2 - q
    return q


def _blur_matrix(size, ksize, sigma):
    """M (size x size) s.t. M @ v == 1-D gaussian blur of v with 'reflect' padding."""
    w1d = _gaussian_kernel1d(ksize, sigma)
    r = ksize // 2
    m = np.zeros((size, size), dtype=np.float64)
    for i in range(size):
        for t in range(ksize):
            j = _reflect_index(i - r + t, size)
            m[i, j] += w1d[t]
    return m


def _gauss_edge_kernel(x_ref, kt_ref, edge_ref, *, hw_real):
    # x_ref:    (TN, HWp)  native-dtype images, one lane-dense row each.
    # kt_ref:   (HWp, HWp) bf16 transposed Kronecker blur operator kron(GH, GW)^T.
    # edge_ref: (TN, HWp)  int8 edge mask output (lane-dense unmasked store).
    x = x_ref[...].astype(jnp.bfloat16)        # cast after DMA: VPU slot, effectively free
    gauss = jnp.dot(x, kt_ref[...], preferred_element_type=jnp.float32)  # MXU, f32 accum
    hw_pad = gauss.shape[-1]
    if hw_real == hw_pad:
        g_min_src, g_max_src = gauss, gauss
    else:
        # Padded lanes hold exact zeros (zero cols of K^T); exclude them from min/max.
        lane = jax.lax.broadcasted_iota(jnp.int32, gauss.shape, 1)
        valid = lane < hw_real
        g_min_src = jnp.where(valid, gauss, jnp.inf)
        g_max_src = jnp.where(valid, gauss, -jnp.inf)
    mn = jnp.min(g_min_src, axis=1, keepdims=True)      # per-image min  (TN, 1)
    mx = jnp.max(g_max_src, axis=1, keepdims=True)      # per-image max  (TN, 1)
    # (g - mn)/(mx - mn) >= 0.1  <=>  g >= mn + 0.1*(mx - mn).  For a constant image
    # torch produces NaN >= 0.1 == False; an inf threshold reproduces that.
    thr = jnp.where(mx > mn, mn + THRESH * (mx - mn), jnp.inf)
    edge_ref[...] = (gauss >= thr).astype(jnp.int8)


def gauss_img_forward(x):
    b, c, n, h, w = x.shape
    assert c == 1, "gauss_img semantics require a single channel (c == 1)"
    assert h > KY // 2 and w > KX // 2, "reflect padding needs dim > kernel radius"
    hw = h * w
    # Dense Kronecker blur operator is (HWp, HWp): 2 MiB bf16 at HWp=1024.
    # TODO(synk): for larger images switch to a separable / banded two-matmul blur.
    assert hw <= 1024, "dense Kronecker blur path is intended for small per-frame images"
    hw_pad = _round_up(hw, LANE)                 # lane-dense pixel axis (>= 128 lanes)

    gh = _blur_matrix(h, KY, SIGMA)              # blur along height (13 taps)
    gw = _blur_matrix(w, KX, SIGMA)              # blur along width  (7 taps)
    # vec_rowmajor(GH @ img @ GW^T) == kron(GH, GW) @ vec_rowmajor(img)
    kt_np = np.kron(gh, gw).T.astype(np.float32)
    if hw_pad != hw:
        kt_np = np.pad(kt_np, ((0, hw_pad - hw), (0, hw_pad - hw)))
    kt = jnp.asarray(kt_np).astype(jnp.bfloat16)            # bf16 MXU operand

    # ---- tile-size / grid selection (VMEM-budgeted, sublane/lane aligned) -----------
    bn = b * n
    in_bytes = jnp.dtype(x.dtype).itemsize
    kt_vmem = 2 * hw_pad * hw_pad * 2            # kt bf16, conservatively double-buffered
    # per-image VMEM bytes: input DMA dbuf + int8 output dbuf + bf16 copy + f32 gauss + temps
    per_img = hw_pad * (2 * in_bytes + 2 * 1 + 2 + 4 + 2)
    tn_cap = ((VMEM_BUDGET - kt_vmem) // per_img) // SUBLANE_I8 * SUBLANE_I8
    tn_cap = min(MAX_TN, max(SUBLANE_I8, tn_cap))

    if bn >= 2:
        g_steps = max(2, -(-bn // tn_cap))       # >= 2 steps so both v7x cores get work
        g_steps += g_steps % 2                   # even split across the two TensorCores
    else:
        g_steps = 1
    tn = min(tn_cap, _round_up(-(-bn // g_steps), SUBLANE_I8))
    bn_pad = g_steps * tn                        # pad b*n up instead of divisor search

    # ---- wrapper-side layout only: reshape (free) + zero-pad (only when needed) -----
    x2 = x.reshape(bn, hw)                       # native dtype; cast happens in-kernel
    if bn_pad != bn or hw_pad != hw:
        x2 = jnp.pad(x2, ((0, bn_pad - bn), (0, hw_pad - hw)))
    x3 = x2.reshape(g_steps, tn, hw_pad)

    vmem_limit = int(min(max(kt_vmem + tn * per_img + (4 << 20), 32 << 20),
                         VMEM_LIMIT_CAP))
    cost = pl.CostEstimate(
        flops=2 * bn_pad * hw_pad * hw_pad,
        transcendentals=0,
        bytes_accessed=bn_pad * hw_pad * (in_bytes + 1) + hw_pad * hw_pad * 2,
    )

    edge_i8 = pl.pallas_call(
        functools.partial(_gauss_edge_kernel, hw_real=hw),
        out_shape=jax.ShapeDtypeStruct((g_steps, tn, hw_pad), jnp.int8),
        grid_spec=pltpu.PrefetchScalarGridSpec(
            num_scalar_prefetch=0,
            grid=(g_steps,),
            in_specs=[
                pl.BlockSpec((None, tn, hw_pad), lambda g: (g, 0, 0)),  # TN images/step
                pl.BlockSpec((hw_pad, hw_pad), lambda g: (0, 0)),       # resident constant
            ],
            out_specs=pl.BlockSpec((None, tn, hw_pad), lambda g: (g, 0, 0)),
        ),
        compiler_params=pltpu.CompilerParams(
            dimension_semantics=("parallel",),
            vmem_limit_bytes=vmem_limit,
        ),
        cost_estimate=cost,
    )(x3, kt)

    # Single narrow mask leaves the kernel; strip padding, nonedge is the complement.
    # TODO(synk): for degenerate constant images torch yields maskNonEdge == all False
    # (NaN compares), whereas the complement here yields all True.
    edge = edge_i8.reshape(bn_pad, hw_pad)[:bn, :hw]
    mask_edge = edge.reshape(b, c, n, h, w).astype(jnp.bool_)
    mask_non_edge = jnp.logical_not(mask_edge)
    return mask_edge, mask_non_edge


def _gauss_img_reference(x):
    """Pure-JAX/XLA f32 reference (separable blur) for correctness checking."""
    b, c, n, h, w = x.shape
    gh = jnp.asarray(_blur_matrix(h, KY, SIGMA).astype(np.float32))
    gw = jnp.asarray(_blur_matrix(w, KX, SIGMA).astype(np.float32))
    imgs = x.astype(jnp.float32).reshape(b * n, h, w)
    gauss = jnp.einsum("ij,bjk,lk->bil", gh, imgs, gw)
    mn = gauss.min(axis=(1, 2), keepdims=True)
    mx = gauss.max(axis=(1, 2), keepdims=True)
    gnorm = (gauss - mn) * (1.0 / (mx - mn))
    edge = (gnorm >= THRESH).reshape(b, c, n, h, w)
    return edge, gnorm.reshape(b, c, n, h, w)


if __name__ == "__main__":
    key = jax.random.PRNGKey(0)
    b, c, n, w = 2, 1, 4, 16
    x = jax.random.normal(key, (b, c, n, w, w), dtype=jnp.float32)

    mask_edge, mask_non_edge = gauss_img_forward(x)
    jax.block_until_ready((mask_edge, mask_non_edge))

    assert mask_edge.shape == (b, c, n, w, w) and mask_edge.dtype == jnp.bool_
    assert mask_non_edge.shape == (b, c, n, w, w) and mask_non_edge.dtype == jnp.bool_
    assert bool(jnp.all(mask_edge ^ mask_non_edge))

    # Cross-check against the f32 separable-blur reference.  bf16 MXU operands (with f32
    # accumulation) can flip pixels whose normalized value sits right at the 0.1
    # threshold, so only mismatches OUTSIDE a small band around the threshold count.
    ref_edge, ref_gnorm = _gauss_img_reference(x)
    near_thr = jnp.abs(ref_gnorm - THRESH) < 4e-2
    hard_mismatch = int(jnp.sum((mask_edge ^ ref_edge) & jnp.logical_not(near_thr)))
    assert hard_mismatch == 0, f"hard mask mismatch count: {hard_mismatch}"

    print("KERNEL_OK")
</pallas_src>

<mosaic_0001>
module attributes {stable_mosaic.version = 11 : i64} {
  func.func @_gauss_edge_kernel(%arg0: i32, %arg1: memref<1x32x256xf32, #tpu.memory_space<vmem>>, %arg2: memref<256x256xbf16, #tpu.memory_space<vmem>>, %arg3: memref<1x32x256xi8, #tpu.memory_space<vmem>>) attributes {dimension_semantics = [#tpu.dimension_semantics<parallel>], iteration_bounds = array<i64: 2>, scalar_prefetch = 0 : i64, scratch_operands = 0 : i64, tpu.core_type = #tpu.core_type<tc>, window_params = [{transform_indices = @transform_0, window_bounds = array<i64: 1, 32, 256>}, {pipeline_mode = #tpu.pipeline_mode<synchronous>, transform_indices = @transform_1, window_bounds = array<i64: 256, 256>}, {transform_indices = @transform_2, window_bounds = array<i64: 1, 32, 256>}]} {
    %c0 = arith.constant 0 : index
    %c0_0 = arith.constant 0 : index
    %c0_1 = arith.constant 0 : index
    %0 = vector.load %arg1[%c0, %c0_0, %c0_1] : memref<1x32x256xf32, #tpu.memory_space<vmem>>, vector<1x32x256xf32>
    %1 = vector.shape_cast %0 : vector<1x32x256xf32> to vector<32x256xf32>
    %2 = arith.truncf %1 : vector<32x256xf32> to vector<32x256xbf16>
    %c0_2 = arith.constant 0 : index
    %c0_3 = arith.constant 0 : index
    %3 = vector.load %arg2[%c0_2, %c0_3] : memref<256x256xbf16, #tpu.memory_space<vmem>>, vector<256x256xbf16>
    %cst = arith.constant dense<0.000000e+00> : vector<32x256xf32>
    %4 = tpu.matmul %2, %3, %cst {dimension_numbers = #tpu.dot_dimension_numbers<[1], [0], [0], [1], [0, 0, 1, 1], [], []>} : vector<32x256xbf16>, vector<256x256xbf16>, vector<32x256xf32> -> vector<32x256xf32>
    %cst_4 = arith.constant dense<0x7F800000> : vector<32xf32>
    %5 = vector.multi_reduction <minimumf>, %4, %cst_4 [1] : vector<32x256xf32> to vector<32xf32>
    %6 = vector.shape_cast %5 : vector<32xf32> to vector<32x1xf32>
    %cst_5 = arith.constant dense<0xFF800000> : vector<32xf32>
    %7 = vector.multi_reduction <maximumf>, %4, %cst_5 [1] : vector<32x256xf32> to vector<32xf32>
    %8 = vector.shape_cast %7 : vector<32xf32> to vector<32x1xf32>
    %9 = arith.cmpf ogt, %8, %6 : vector<32x1xf32>
    %10 = arith.subf %8, %6 : vector<32x1xf32>
    %cst_6 = arith.constant 1.000000e-01 : f32
    %11 = vector.broadcast %cst_6 : f32 to vector<32x1xf32>
    %12 = arith.mulf %11, %10 : vector<32x1xf32>
    %13 = arith.addf %6, %12 : vector<32x1xf32>
    %cst_7 = arith.constant 0x7F800000 : f32
    %14 = vector.broadcast %cst_7 : f32 to vector<32x1xf32>
    %15 = arith.select %9, %13, %14 : vector<32x1xi1>, vector<32x1xf32>
    %16 = vector.broadcast %15 : vector<32x1xf32> to vector<32x256xf32>
    %17 = arith.cmpf oge, %4, %16 : vector<32x256xf32>
    %18 = arith.extui %17 : vector<32x256xi1> to vector<32x256xi8>
    %c0_8 = arith.constant 0 : index
    %c0_9 = arith.constant 0 : index
    %c0_10 = arith.constant 0 : index
    %19 = vector.load %arg3[%c0_8, %c0_9, %c0_10] : memref<1x32x256xi8, #tpu.memory_space<vmem>>, vector<1x32x256xi8>
    %20 = vector.shape_cast %19 : vector<1x32x256xi8> to vector<32x256xi8>
    %21 = vector.shape_cast %18 : vector<32x256xi8> to vector<1x32x256xi8>
    tpu.vector_store %arg3[%c0_8, %c0_9, %c0_10], %21 {strides = array<i32>} : memref<1x32x256xi8, #tpu.memory_space<vmem>>, vector<1x32x256xi8>,
    return
  }
  func.func @transform_0(%arg0: i32) -> (i32, i32, i32) {
    %c0_i32 = arith.constant 0 : i32
    %c0_i32_0 = arith.constant 0 : i32
    %c0_i32_1 = arith.constant 0 : i32
    return %arg0, %c0_i32, %c0_i32_0 : i32, i32, i32
  }
  func.func @transform_1(%arg0: i32) -> (i32, i32) {
    %c0_i32 = arith.constant 0 : i32
    %c0_i32_0 = arith.constant 0 : i32
    %c0_i32_1 = arith.constant 0 : i32
    return %c0_i32, %c0_i32_0 : i32, i32
  }
  func.func @transform_2(%arg0: i32) -> (i32, i32, i32) {
    %c0_i32 = arith.constant 0 : i32
    %c0_i32_0 = arith.constant 0 : i32
    %c0_i32_1 = arith.constant 0 : i32
    return %arg0, %c0_i32, %c0_i32_0 : i32, i32, i32
  }
}

</mosaic_0001>

<llo_original>
// kernel: tpu_custom_call.1
$region0: #{tpu_custom_call.1}
  #allocation0 [shape = 'u32[]', space=smem, size = 0x4, offset = 0x4, fixed_abs, tag = 'smem constant byte address 0x4 - core index']
  #allocation1 [shape = 'u32[72,128]{1,0:T(1,128)}', space=vmem, size = 0x9000, scoped, tag = 'internal scratch']
  %s0 = inlined_call_operand.hbm [shape: f32[2,32,256], index: 0, kind: input, shape index: {}]
  %s1 = inlined_call_operand.hbm [shape: bf16[256,256], index: 1, kind: input, shape index: {}]
  %s2 = inlined_call_operand.hbm [shape: s8[2,32,256], index: 2, kind: output, shape index: {}]
  %s3 = sld [smem:[#allocation0]]
  $region49: #{tpu_custom_call.1} parent=0
    _
  %s5 = ssub.s32 1, %s3
  %s6 = scalar_select 0, %s5, %s3
  $region1: #{tpu_custom_call.1} parent=0
    #allocation2 [shape = 'u8[65536]{0}', space=vmem, size = 0x10000, scoped, tag = 'input window, operand 0']
    #allocation3 [shape = 's32[2]{0}', space=sflag, size = 0x8, scoped, tag = 'scoped memory for tpu_custom_call.1']
    #allocation4 [shape = 's32[2]{0}', space=sflag, size = 0x8, scoped, tag = 'scoped memory for tpu_custom_call.1']
    #allocation5 [shape = 'u8[131072]{0}', space=vmem, size = 0x20000, scoped, tag = 'input window, operand 1, single buffered']
    #allocation6 [shape = 's32[1]{0}', space=sflag, size = 0x4, scoped, tag = 'scoped memory for tpu_custom_call.1']
    #allocation7 [shape = 'u8[16384]{0}', space=vmem, size = 0x4000, scoped, tag = 'output window, operand 0']
    %7 = vsyncpa [#allocation3], 0
    %s8 = scalar_lea.sflag [#allocation3], 1
    %9 = vsyncpa %s8, 0
    %10 = vsyncpa [#allocation6], 0
    %11 = vsyncpa [#allocation4], 0
    %s12 = scalar_lea.sflag [#allocation4], 1
    %13 = vsyncpa %s12, 0
    loop: start=0, step=1, limit=4
    $region2: #{tpu_custom_call.1} parent=1 // loop_pre_header
      _
    $region3: #{tpu_custom_call.1} parent=1 // loop_header
      %s15 = sphi 0, %s19
      %p16 = scmp.ge.s32.totalorder %s15, 4
      %s25 = sphi 0, %s27
      %s28 = sphi 0, %s25
      %s29 = sphi 0, %s28
      %s45 = sphi 0, %s29
      %s49 = sphi 0, %s49
      %s51 = sphi 0, %s49
      %s52 = sphi 0, %s51
      %s66 = sphi 0, %s52
      %s72 = sphi 0, %s74
      %s75 = sphi 0, %s72
      %s76 = sphi 0, %s75
      %s92 = sphi 0, %s76
    $region4: #{tpu_custom_call.1} parent=1 // loop_header_branch
      %18 = sbr.rel (%p16) target = $region8
    $region5: #{tpu_custom_call.1} parent=1 // loop_body
      %s20 = ssub.s32 %s15, 1
      %s21 = ssub.s32 %s15, 2
      %s22 = sadd.s32 %s15, 1
      %s23 = ssub.s32 %s15, %s22
      %p24 = scmp.eq.s32.totalorder %s23, 0
      %s26 = sadd.s32 %s25, 1
      %s27 = scalar_select %p24, %s25, %s26
      %p30 = pneg %p24
      %p31 = scmp.eq.s32.totalorder %s15, 1
      %p32 = por %p30, %p31
      %p33 = scmp.ne.s32.totalorder %s25, %s28
      %p34 = scmp.eq.s32.totalorder %s15, 0
      %p35 = por %p33, %p34
      %p36 = scmp.ne.s32.totalorder %s25, %s28
      %p37 = scmp.eq.s32.totalorder %s20, 1
      %p38 = por %p36, %p37
      %p39 = scmp.ne.s32.totalorder %s28, %s29
      %p40 = scmp.eq.s32.totalorder %s20, 0
      %p41 = por %p39, %p40
      %p42 = scmp.ne.s32.totalorder %s28, %s29
      %p43 = scmp.eq.s32.totalorder %s21, 1
      %p44 = por %p42, %p43
      %p46 = scmp.ne.s32.totalorder %s29, %s45
      %p47 = scmp.eq.s32.totalorder %s21, 0
      %p48 = por %p46, %p47
      %s50 = sadd.s32 %s49, 1
      %p53 = scmp.eq.s32.totalorder %s15, 1
      %p54 = scmp.ne.s32.totalorder %s49, %s51
      %p55 = scmp.eq.s32.totalorder %s15, 0
      %p56 = por %p54, %p55
      %p57 = scmp.ne.s32.totalorder %s49, %s51
      %p58 = scmp.eq.s32.totalorder %s20, 1
      %p59 = por %p57, %p58
      %p60 = scmp.ne.s32.totalorder %s51, %s52
      %p61 = scmp.eq.s32.totalorder %s20, 0
      %p62 = por %p60, %p61
      %p63 = scmp.ne.s32.totalorder %s51, %s52
      %p64 = scmp.eq.s32.totalorder %s21, 1
      %p65 = por %p63, %p64
      %p67 = scmp.ne.s32.totalorder %s52, %s66
      %p68 = scmp.eq.s32.totalorder %s21, 0
      %p69 = por %p67, %p68
      %s70 = ssub.s32 %s15, %s22
      %p71 = scmp.eq.s32.totalorder %s70, 0
      %s73 = sadd.s32 %s72, 1
      %s74 = scalar_select %p71, %s72, %s73
      %p77 = pneg %p71
      %p78 = scmp.eq.s32.totalorder %s15, 1
      %p79 = por %p77, %p78
      %p80 = scmp.ne.s32.totalorder %s72, %s75
      %p81 = scmp.eq.s32.totalorder %s15, 0
      %p82 = por %p80, %p81
      %p83 = scmp.ne.s32.totalorder %s72, %s75
      %p84 = scmp.eq.s32.totalorder %s20, 1
      %p85 = por %p83, %p84
      %p86 = scmp.ne.s32.totalorder %s75, %s76
      %p87 = scmp.eq.s32.totalorder %s20, 0
      %p88 = por %p86, %p87
      %p89 = scmp.ne.s32.totalorder %s75, %s76
      %p90 = scmp.eq.s32.totalorder %s21, 1
      %p91 = por %p89, %p90
      %p93 = scmp.ne.s32.totalorder %s76, %s92
      %p94 = scmp.eq.s32.totalorder %s21, 0
      %p95 = por %p93, %p94
      %p96 = scmp.le.s32.totalorder 1, %s15
      %p97 = scmp.lt.s32.totalorder %s15, 3
      %p98 = pnand %p96, %p97
      %p99 = pneg %p98
      // Predicated region
      $region9: #{tpu_custom_call.1} parent=5 // pred_check
        _
      $region10: #{tpu_custom_call.1} parent=5 // pred_check_branch
        %101 = sbr.rel (%p98) target = $region12
      $region11: #{tpu_custom_call.1} parent=5 // pred_region
        %s102 = ssub.s32 %s15, 1
        // Predicated region
        $region13: #{tpu_custom_call.1} parent=11 // pred_check
          %p103 = pneg %p62
        $region14: #{tpu_custom_call.1} parent=11 // pred_check_branch
          %105 = sbr.rel (%p103) target = $region16
        $region15: #{tpu_custom_call.1} parent=11 // pred_region
          %107 = vsyncadd [#allocation6], 0
          %s108 = sshll.u32 %s1, 4
          %s109 = int_to_ptr.hbm [resolvable:$true] %s108
          %s110 = sshll.u32 [#allocation5], 4
          %s111 = int_to_ptr.vmem [resolvable:$true] %s110
          %116 = dma.hbm_to_vmem [thread:$0]  %s109, 4096, %s111, [#allocation6], 128, 128, 8
        $region16: #{tpu_custom_call.1} parent=11 // pred_fallthru
          _
      $region12: #{tpu_custom_call.1} parent=5 // pred_fallthru
        _
      %p117 = scmp.lt.s32.totalorder %s15, 2
      // Predicated region
      $region17: #{tpu_custom_call.1} parent=5 // pred_check
        %p118 = pneg %p117
      $region18: #{tpu_custom_call.1} parent=5 // pred_check_branch
        %120 = sbr.rel (%p118) target = $region20
      $region19: #{tpu_custom_call.1} parent=5 // pred_region
        // Predicated region
        $region21: #{tpu_custom_call.1} parent=19 // pred_check
          %p121 = pneg %p35
        $region22: #{tpu_custom_call.1} parent=19 // pred_check_branch
          %123 = sbr.rel (%p121) target = $region24
        $region23: #{tpu_custom_call.1} parent=19 // pred_region
          %s124 = sand.u32 %s25, 1
          %s125 = scalar_lea.sflag [#allocation3], %s124
          %s126 = sand.u32 %s25, 1
          %s127 = smul.addr %s126, 64
          %s128 = scalar_lea.vmem [#allocation2], %s127
          %130 = vsyncadd %s125, 0
          %s131 = smul.addr %s15, 8
          %s132 = smul.addr %s131, 8
          %s133 = scalar_lea.hbm %s0, %s132
          %s134 = sshll.u32 %s133, 4
          %s135 = int_to_ptr.hbm [resolvable:$true] %s134
          %s136 = sshll.u32 %s128, 4
          %s137 = int_to_ptr.vmem [resolvable:$true] %s136
          %142 = dma.hbm_to_vmem [thread:$0]  %s135, 1024, %s137, %s125, 256, 256, 16
        $region24: #{tpu_custom_call.1} parent=19 // pred_fallthru
          _
      $region20: #{tpu_custom_call.1} parent=5 // pred_fallthru
        _
      %p143 = scmp.le.s32.totalorder 1, %s15
      %p144 = scmp.lt.s32.totalorder %s15, 3
      %p145 = pnand %p143, %p144
      %p146 = pneg %p145
      // Predicated region
      $region25: #{tpu_custom_call.1} parent=5 // pred_check
        _
      $region26: #{tpu_custom_call.1} parent=5 // pred_check_branch
        %148 = sbr.rel (%p145) target = $region28
      $region27: #{tpu_custom_call.1} parent=5 // pred_region
        %s149 = ssub.s32 %s15, 1
        %s150 = sand.u32 %s28, 1
        %s151 = scalar_lea.sflag [#allocation3], %s150
        %s152 = sand.u32 %s28, 1
        %s153 = smul.addr %s152, 64
        %s154 = scalar_lea.vmem [#allocation2], %s153
        // Predicated region
        $region29: #{tpu_custom_call.1} parent=27 // pred_check
          %p155 = pneg %p41
        $region30: #{tpu_custom_call.1} parent=27 // pred_check_branch
          %157 = sbr.rel (%p155) target = $region32
        $region31: #{tpu_custom_call.1} parent=27 // pred_region
          %159 = dma.done %s151, 1024
        $region32: #{tpu_custom_call.1} parent=27 // pred_fallthru
          _
        // Predicated region
        $region33: #{tpu_custom_call.1} parent=27 // pred_check
          %p160 = pneg %p62
        $region34: #{tpu_custom_call.1} parent=27 // pred_check_branch
          %162 = sbr.rel (%p160) target = $region36
        $region35: #{tpu_custom_call.1} parent=27 // pred_region
          %164 = dma.done [#allocation6], 4096
        $region36: #{tpu_custom_call.1} parent=27 // pred_fallthru
          _
        %s165 = sand.u32 %s28, 1
        %s166 = scalar_lea.sflag [#allocation3], %s165
        %s167 = sand.u32 %s28, 1
        %s168 = smul.addr %s167, 64
        %s169 = scalar_lea.vmem [#allocation2], %s168
        %p170 = pneg %p41
        %p171 = pneg %p38
        %p172 = pneg %p62
        %p173 = pneg %p59
        %p174 = pneg %p88
        %p175 = pneg %p85
        %s176 = sand.u32 %s75, 1
        %s177 = scalar_lea.sflag [#allocation4], %s176
        %s178 = sand.u32 %s75, 1
        %s179 = smul.addr %s178, 16
        %s180 = scalar_lea.vmem [#allocation7], %s179
        %v183 = vld [vmem:[%s154] sm:$0xff]
        %v184 = vld [vmem:[%s154 + $0x8] sm:$0xff]
        %v185 = vld [vmem:[%s154 + $0x10] sm:$0xff]
        %v186 = vld [vmem:[%s154 + $0x18] sm:$0xff]
        %v187 = vld [vmem:[%s154 + $0x20] sm:$0xff]
        %v188 = vld [vmem:[%s154 + $0x28] sm:$0xff]
        %v189 = vld [vmem:[%s154 + $0x30] sm:$0xff]
        %v190 = vld [vmem:[%s154 + $0x38] sm:$0xff]
        %v191 = vpack.c.bf16 %v185, %v183
        %v192 = vpack.c.bf16 %v186, %v184
        %v193 = vpack.c.bf16 %v189, %v187
        %v194 = vpack.c.bf16 %v190, %v188
        %v195 = vld [vmem:[#allocation5] sm:$0xff]
        %v196 = vld [vmem:[#allocation5 + $0x8] sm:$0xff]
        %v197 = vld [vmem:[#allocation5 + $0x10] sm:$0xff]
        %v198 = vld [vmem:[#allocation5 + $0x18] sm:$0xff]
        %v199 = vld [vmem:[#allocation5 + $0x20] sm:$0xff]
        %v200 = vld [vmem:[#allocation5 + $0x28] sm:$0xff]
        %v201 = vld [vmem:[#allocation5 + $0x30] sm:$0xff]
        %v202 = vld [vmem:[#allocation5 + $0x38] sm:$0xff]
        %v203 = vld [vmem:[#allocation5 + $0x40] sm:$0xff]
        %v204 = vld [vmem:[#allocation5 + $0x48] sm:$0xff]
        %v205 = vld [vmem:[#allocation5 + $0x50] sm:$0xff]
        %v206 = vld [vmem:[#allocation5 + $0x58] sm:$0xff]
        %v207 = vld [vmem:[#allocation5 + $0x60] sm:$0xff]
        %v208 = vld [vmem:[#allocation5 + $0x68] sm:$0xff]
        %v209 = vld [vmem:[#allocation5 + $0x70] sm:$0xff]
        %v210 = vld [vmem:[#allocation5 + $0x78] sm:$0xff]
        %v211 = vld [vmem:[#allocation5 + $0x80] sm:$0xff]
        %v212 = vld [vmem:[#allocation5 + $0x88] sm:$0xff]
        %v213 = vld [vmem:[#allocation5 + $0x90] sm:$0xff]
        %v214 = vld [vmem:[#allocation5 + $0x98] sm:$0xff]
        %v215 = vld [vmem:[#allocation5 + $0xa0] sm:$0xff]
        %v216 = vld [vmem:[#allocation5 + $0xa8] sm:$0xff]
        %v217 = vld [vmem:[#allocation5 + $0xb0] sm:$0xff]
        %v218 = vld [vmem:[#allocation5 + $0xb8] sm:$0xff]
        %v219 = vld [vmem:[#allocation5 + $0xc0] sm:$0xff]
        %v220 = vld [vmem:[#allocation5 + $0xc8] sm:$0xff]
        %v221 = vld [vmem:[#allocation5 + $0xd0] sm:$0xff]
        %v222 = vld [vmem:[#allocation5 + $0xd8] sm:$0xff]
        %v223 = vld [vmem:[#allocation5 + $0xe0] sm:$0xff]
        %v224 = vld [vmem:[#allocation5 + $0xe8] sm:$0xff]
        %v225 = vld [vmem:[#allocation5 + $0xf0] sm:$0xff]
        %v226 = vld [vmem:[#allocation5 + $0xf8] sm:$0xff]
        %v259 = vunpack.c.l.b16 %v195
        %v260 = vunpack.c.h.b16 %v195
        %v261 = vunpack.c.l.b16 %v196
        %v262 = vunpack.c.h.b16 %v196
        %v263 = vunpack.c.l.b16 %v197
        %v264 = vunpack.c.h.b16 %v197
        %v265 = vunpack.c.l.b16 %v198
        %v266 = vunpack.c.h.b16 %v198
        %v267 = vunpack.c.l.b16 %v199
        %v268 = vunpack.c.h.b16 %v199
        %v269 = vunpack.c.l.b16 %v200
        %v270 = vunpack.c.h.b16 %v200
        %v271 = vunpack.c.l.b16 %v201
        %v272 = vunpack.c.h.b16 %v201
        %v273 = vunpack.c.l.b16 %v202
        %v274 = vunpack.c.h.b16 %v202
        %v275 = vunpack.c.l.b16 %v203
        %v276 = vunpack.c.h.b16 %v203
        %v277 = vunpack.c.l.b16 %v204
        %v278 = vunpack.c.h.b16 %v204
        %v279 = vunpack.c.l.b16 %v205
        %v280 = vunpack.c.h.b16 %v205
        %v281 = vunpack.c.l.b16 %v206
        %v282 = vunpack.c.h.b16 %v206
        %v283 = vunpack.c.l.b16 %v207
        %v284 = vunpack.c.h.b16 %v207
        %v285 = vunpack.c.l.b16 %v208
        %v286 = vunpack.c.h.b16 %v208
        %v287 = vunpack.c.l.b16 %v209
        %v288 = vunpack.c.h.b16 %v209
        %v289 = vunpack.c.l.b16 %v210
        %v290 = vunpack.c.h.b16 %v210
        %v291 = vunpack.c.l.b16 %v211
        %v292 = vunpack.c.h.b16 %v211
        %v293 = vunpack.c.l.b16 %v212
        %v294 = vunpack.c.h.b16 %v212
        %v295 = vunpack.c.l.b16 %v213
        %v296 = vunpack.c.h.b16 %v213
        %v297 = vunpack.c.l.b16 %v214
        %v298 = vunpack.c.h.b16 %v214
        %v299 = vunpack.c.l.b16 %v215
        %v300 = vunpack.c.h.b16 %v215
        %v301 = vunpack.c.l.b16 %v216
        %v302 = vunpack.c.h.b16 %v216
        %v303 = vunpack.c.l.b16 %v217
        %v304 = vunpack.c.h.b16 %v217
        %v305 = vunpack.c.l.b16 %v218
        %v306 = vunpack.c.h.b16 %v218
        %v307 = vunpack.c.l.b16 %v219
        %v308 = vunpack.c.h.b16 %v219
        %v309 = vunpack.c.l.b16 %v220
        %v310 = vunpack.c.h.b16 %v220
        %v311 = vunpack.c.l.b16 %v221
        %v312 = vunpack.c.h.b16 %v221
        %v313 = vunpack.c.l.b16 %v222
        %v314 = vunpack.c.h.b16 %v222
        %v315 = vunpack.c.l.b16 %v223
        %v316 = vunpack.c.h.b16 %v223
        %v317 = vunpack.c.l.b16 %v224
        %v318 = vunpack.c.h.b16 %v224
        %v319 = vunpack.c.l.b16 %v225
        %v320 = vunpack.c.h.b16 %v225
        %v321 = vunpack.c.l.b16 %v226
        %v322 = vunpack.c.h.b16 %v226
        %v323 = vpack.c.b16 %v261, %v259
        %v324 = vpack.c.b16 %v262, %v260
        %v325 = vpack.c.b16 %v265, %v263
        %v326 = vpack.c.b16 %v266, %v264
        %v327 = vpack.c.b16 %v269, %v267
        %v328 = vpack.c.b16 %v270, %v268
        %v329 = vpack.c.b16 %v273, %v271
        %v330 = vpack.c.b16 %v274, %v272
        %v331 = vpack.c.b16 %v277, %v275
        %v332 = vpack.c.b16 %v278, %v276
        %v333 = vpack.c.b16 %v281, %v279
        %v334 = vpack.c.b16 %v282, %v280
        %v335 = vpack.c.b16 %v285, %v283
        %v336 = vpack.c.b16 %v286, %v284
        %v337 = vpack.c.b16 %v289, %v287
        %v338 = vpack.c.b16 %v290, %v288
        %v339 = vpack.c.b16 %v293, %v291
        %v340 = vpack.c.b16 %v294, %v292
        %v341 = vpack.c.b16 %v297, %v295
        %v342 = vpack.c.b16 %v298, %v296
        %v343 = vpack.c.b16 %v301, %v299
        %v344 = vpack.c.b16 %v302, %v300
        %v345 = vpack.c.b16 %v305, %v303
        %v346 = vpack.c.b16 %v306, %v304
        %v347 = vpack.c.b16 %v309, %v307
        %v348 = vpack.c.b16 %v310, %v308
        %v349 = vpack.c.b16 %v313, %v311
        %v350 = vpack.c.b16 %v314, %v312
        %v351 = vpack.c.b16 %v317, %v315
        %v352 = vpack.c.b16 %v318, %v316
        %v353 = vpack.c.b16 %v321, %v319
        %v354 = vpack.c.b16 %v322, %v320
        %387 = vmatpush.bf16.msra.mxu0 %v337
        %388 = vmatpush.bf16.msra.mxu0 %v335
        %389 = vmatpush.bf16.msra.mxu0 %v333
        %390 = vmatpush.bf16.msra.mxu0 %v331
        %391 = vmatpush.bf16.msra.mxu0 %v329
        %392 = vmatpush.bf16.msra.mxu0 %v327
        %393 = vmatpush.bf16.msra.mxu0 %v325
        %394 = vmatpush.bf16.msra.mxu0 %v323
        %395 = vmatmul.bf16.gmra.mxu0 %v191
        %v396 = vpop.f32.mrf.mxu0
        %v397 = vadd.f32 0.0, %v396
        %v398 = vpop.f32.mrf.mxu0
        %v399 = vadd.f32 0.0, %v398
        %400 = vmatmul.bf16.gmra.mxu0 %v193
        %v401 = vpop.f32.mrf.mxu0
        %v402 = vadd.f32 0.0, %v401
        %v403 = vpop.f32.mrf.mxu0
        %v404 = vadd.f32 0.0, %v403
        %405 = vdwg.mxu0
        %406 = vmatpush.bf16.msra.mxu0 %v353
        %407 = vmatpush.bf16.msra.mxu0 %v351
        %408 = vmatpush.bf16.msra.mxu0 %v349
        %409 = vmatpush.bf16.msra.mxu0 %v347
        %410 = vmatpush.bf16.msra.mxu0 %v345
        %411 = vmatpush.bf16.msra.mxu0 %v343
        %412 = vmatpush.bf16.msra.mxu0 %v341
        %413 = vmatpush.bf16.msra.mxu0 %v339
        %414 = vmatmul.bf16.gmra.mxu0 %v192
        %v415 = vpop.f32.mrf.mxu0
        %v416 = vadd.f32 %v397, %v415
        %v417 = vpop.f32.mrf.mxu0
        %v418 = vadd.f32 %v399, %v417
        %419 = vmatmul.bf16.gmra.mxu0 %v194
        %v420 = vpop.f32.mrf.mxu0
        %v421 = vadd.f32 %v402, %v420
        %v422 = vpop.f32.mrf.mxu0
        %v423 = vadd.f32 %v404, %v422
        %424 = vdwg.mxu0
        %425 = vmatpush.bf16.msra.mxu0 %v338
        %426 = vmatpush.bf16.msra.mxu0 %v336
        %427 = vmatpush.bf16.msra.mxu0 %v334
        %428 = vmatpush.bf16.msra.mxu0 %v332
        %429 = vmatpush.bf16.msra.mxu0 %v330
        %430 = vmatpush.bf16.msra.mxu0 %v328
        %431 = vmatpush.bf16.msra.mxu0 %v326
        %432 = vmatpush.bf16.msra.mxu0 %v324
        %433 = vmatmul.bf16.gmra.mxu0 %v191
        %v434 = vpop.f32.mrf.mxu0
        %v435 = vadd.f32 0.0, %v434
        %v436 = vpop.f32.mrf.mxu0
        %v437 = vadd.f32 0.0, %v436
        %438 = vmatmul.bf16.gmra.mxu0 %v193
        %v439 = vpop.f32.mrf.mxu0
        %v440 = vadd.f32 0.0, %v439
        %v441 = vpop.f32.mrf.mxu0
        %v442 = vadd.f32 0.0, %v441
        %443 = vdwg.mxu0
        %444 = vmatpush.bf16.msra.mxu0 %v354
        %445 = vmatpush.bf16.msra.mxu0 %v352
        %446 = vmatpush.bf16.msra.mxu0 %v350
        %447 = vmatpush.bf16.msra.mxu0 %v348
        %448 = vmatpush.bf16.msra.mxu0 %v346
        %449 = vmatpush.bf16.msra.mxu0 %v344
        %450 = vmatpush.bf16.msra.mxu0 %v342
        %451 = vmatpush.bf16.msra.mxu0 %v340
        %452 = vmatmul.bf16.gmra.mxu0 %v192
        %v453 = vpop.f32.mrf.mxu0
        %v454 = vadd.f32 %v435, %v453
        %v455 = vpop.f32.mrf.mxu0
        %v456 = vadd.f32 %v437, %v455
        %457 = vmatmul.bf16.gmra.mxu0 %v194
        %v458 = vpop.f32.mrf.mxu0
        %v459 = vadd.f32 %v440, %v458
        %v460 = vpop.f32.mrf.mxu0
        %v461 = vadd.f32 %v442, %v460
        %462 = vdwg.mxu0
        %v463 = vmin.f32 %v416, %v454
        %464 = vmin.xlane.f32.xlu0 %v463
        %v465 = vpop.xlane.xlu0 %464
        %v466 = vmin.f32 %v418, %v456
        %467 = vmin.xlane.f32.xlu0 %v466
        %v468 = vpop.xlane.xlu0 %467
        %v469 = vmin.f32 %v421, %v459
        %470 = vmin.xlane.f32.xlu0 %v469
        %v471 = vpop.xlane.xlu0 %470
        %v472 = vmin.f32 %v423, %v461
        %473 = vmin.xlane.f32.xlu0 %v472
        %v474 = vpop.xlane.xlu0 %473
        %v475 = vmax.f32 %v416, %v454
        %476 = vmax.xlane.f32.xlu0 %v475
        %v477 = vpop.xlane.xlu0 %476
        %v478 = vmax.f32 %v418, %v456
        %479 = vmax.xlane.f32.xlu0 %v478
        %v480 = vpop.xlane.xlu0 %479
        %v481 = vmax.f32 %v421, %v459
        %482 = vmax.xlane.f32.xlu0 %v481
        %v483 = vpop.xlane.xlu0 %482
        %v484 = vmax.f32 %v423, %v461
        %485 = vmax.xlane.f32.xlu0 %v484
        %v486 = vpop.xlane.xlu0 %485
        %vm487 = vcmp.gt.f32.partialorder %v477, %v465
        %vm488 = vcmp.gt.f32.partialorder %v480, %v468
        %vm489 = vcmp.gt.f32.partialorder %v483, %v471
        %vm490 = vcmp.gt.f32.partialorder %v486, %v474
        %v491 = vsub.f32 %v477, %v465
        %v492 = vsub.f32 %v480, %v468
        %v493 = vsub.f32 %v483, %v471
        %v494 = vsub.f32 %v486, %v474
        %v495 = vmul.f32 %v491, 0.1
        %v496 = vmul.f32 %v492, 0.1
        %v497 = vmul.f32 %v493, 0.1
        %v498 = vmul.f32 %v494, 0.1
        %v499 = vadd.f32 %v465, %v495
        %v500 = vadd.f32 %v468, %v496
        %v501 = vadd.f32 %v471, %v497
        %v502 = vadd.f32 %v474, %v498
        %v503 = vsel %vm487, %v499, inf
        %v504 = vsel %vm488, %v500, inf
        %v505 = vsel %vm489, %v501, inf
        %v506 = vsel %vm490, %v502, inf
        %vm507 = vcmp.ge.f32.partialorder %v416, %v503
        %vm508 = vcmp.ge.f32.partialorder %v454, %v503
        %vm509 = vcmp.ge.f32.partialorder %v418, %v504
        %vm510 = vcmp.ge.f32.partialorder %v456, %v504
        %vm511 = vcmp.ge.f32.partialorder %v421, %v505
        %vm512 = vcmp.ge.f32.partialorder %v459, %v505
        %vm513 = vcmp.ge.f32.partialorder %v423, %v506
        %vm514 = vcmp.ge.f32.partialorder %v461, %v506
        %vm515 = vmpackc.low %vm509, %vm507
        %vm516 = vmpackc.low %vm513, %vm511
        %v517 = vsel %vm515, 16711935, 0
        %v518 = vsel %vm516, 16711935, 0
        %v519 = vpack.c.b8 %v518, %v517
        %vm520 = vnez %v519
        %vm521 = vmpackc.low %vm510, %vm508
        %vm522 = vmpackc.low %vm514, %vm512
        %v523 = vsel %vm521, 16711935, 0
        %v524 = vsel %vm522, 16711935, 0
        %v525 = vpack.c.b8 %v524, %v523
        %vm526 = vnez %v525
        %v527 = vsel %vm520, 16843009, 0
        %v528 = vsel %vm526, 16843009, 0
        %529 = vst [vmem:[%s180] sm:$0xff] %v527
        %530 = vst [vmem:[%s180 + $0x8] sm:$0xff] %v528
        %s531 = sand.u32 %s75, 1
        %s532 = scalar_lea.sflag [#allocation4], %s531
        %s533 = sand.u32 %s75, 1
        %s534 = smul.addr %s533, 16
        %s535 = scalar_lea.vmem [#allocation7], %s534
        // Predicated region
        $region37: #{tpu_custom_call.1} parent=27 // pred_check
          %p536 = pneg %p85
        $region38: #{tpu_custom_call.1} parent=27 // pred_check_branch
          %538 = sbr.rel (%p536) target = $region40
        $region39: #{tpu_custom_call.1} parent=27 // pred_region
          %540 = vsyncadd %s532, 0
          %s541 = smul.addr %s20, 2
          %s542 = smul.addr %s541, 8
          %s543 = scalar_lea.hbm %s2, %s542
          %s545 = sshll.u32 %s535, 4
          %s546 = int_to_ptr.vmem [resolvable:$true] %s545
          %s547 = sshll.u32 %s543, 4
          %s548 = int_to_ptr.hbm [resolvable:$true] %s547
          %550 = dma.vmem_to_hbm [thread:$0]  %s546, 256, %s548, %s532
        $region40: #{tpu_custom_call.1} parent=27 // pred_fallthru
          _
      $region28: #{tpu_custom_call.1} parent=5 // pred_fallthru
        _
      %p551 = scmp.le.s32.totalorder 2, %s15
      // Predicated region
      $region41: #{tpu_custom_call.1} parent=5 // pred_check
        %p552 = pneg %p551
      $region42: #{tpu_custom_call.1} parent=5 // pred_check_branch
        %554 = sbr.rel (%p552) target = $region44
      $region43: #{tpu_custom_call.1} parent=5 // pred_region
        %s555 = ssub.s32 %s15, 2
        // Predicated region
        $region45: #{tpu_custom_call.1} parent=43 // pred_check
          %p556 = pneg %p91
        $region46: #{tpu_custom_call.1} parent=43 // pred_check_branch
          %558 = sbr.rel (%p556) target = $region48
        $region47: #{tpu_custom_call.1} parent=43 // pred_region
          %s559 = sand.u32 %s76, 1
          %s560 = scalar_lea.sflag [#allocation4], %s559
          %s561 = sand.u32 %s76, 1
          %s562 = smul.addr %s561, 16
          %s563 = scalar_lea.vmem [#allocation7], %s562
          %565 = dma.done %s560, 256
        $region48: #{tpu_custom_call.1} parent=43 // pred_fallthru
          _
      $region44: #{tpu_custom_call.1} parent=5 // pred_fallthru
        _
    $region6: #{tpu_custom_call.1} parent=1 // loop_footer
      %s19 = sadd.s32 1, %s15
    $region7: #{tpu_custom_call.1} parent=1 // loop_footer_branch
      %14 = sbr.rel target = $region3
    $region8: #{tpu_custom_call.1} parent=1 // loop_exit
      _
    %566 = vsyncpa [#allocation3], 1
    %s567 = scalar_lea.sflag [#allocation3], 1
    %568 = vsyncpa %s567, 1
    %569 = vsyncpa [#allocation6], 1
    %570 = vsyncpa [#allocation4], 1
    %s571 = scalar_lea.sflag [#allocation4], 1
    %572 = vsyncpa %s571, 1

</llo_original>
